<compile_context>
chip_gen: v7x
topology: tpu7x:2x2x1
jax: 0.10.0
libtpu: 0.0.40
codegen_flags: <defaults>
</compile_context>

<pallas_src>
from functools import partial

import jax
import jax.numpy as jnp
from jax.experimental import pallas as pl
from jax.experimental.pallas import tpu as pltpu


def _round_up(v, m):
    return (v + m - 1) // m * m


def _cdiv(a, b):
    return -(-a // b)


def _pick_row_block(R, max_rows):
    """Largest multiple-of-8 divisor of R that is <= max_rows, else R."""
    if R <= max_rows:
        return R
    d = (max_rows // 8) * 8
    while d >= 8:
        if R % d == 0:
            return d
        d -= 8
    return R


# --------------------------------------------------------------------------
# Kernel 1: streamed spatial pooled-mean over a lane-dense (B*C_in, H*W) slab.
# --------------------------------------------------------------------------
def _pool_sum_kernel(x_ref, pooled_ref, acc_ref, *, hw, thw, inv_hw, ragged):
    t = pl.program_id(1)

    @pl.when(t == 0)
    def _init():
        acc_ref[...] = jnp.zeros_like(acc_ref)

    xv = x_ref[...]                                             # (RB, THW) f32
    if ragged:
        # Out-of-range lanes of the edge tile hold unspecified data: mask them.
        lane = jax.lax.broadcasted_iota(jnp.int32, xv.shape, 1) + t * thw
        xv = jnp.where(lane < hw, xv, 0.0)

    # Lane-blocked partial sums: (RB, THW) -> (RB, 128) with pure VPU adds
    # (tree reduce over 128-lane chunks; no XLU, no masked stores).
    nchunks = thw // 128
    parts = [xv[:, c * 128:(c + 1) * 128] for c in range(nchunks)]
    while len(parts) > 1:
        nxt = []
        for i in range(0, len(parts) - 1, 2):
            nxt.append(parts[i] + parts[i + 1])
        if len(parts) % 2:
            nxt.append(parts[-1])
        parts = nxt
    acc_ref[...] += parts[0]

    # Epilogue: one cross-lane reduce + scaled write, only on the last tile.
    @pl.when(t == pl.num_programs(1) - 1)
    def _fin():
        pooled_ref[...] = (jnp.sum(acc_ref[...], axis=-1, keepdims=True)
                           * inv_hw).astype(pooled_ref.dtype)


# --------------------------------------------------------------------------
# Kernel 2: tiny lane-padded epilogue (fc + BN + ReLU + fused heads).
# --------------------------------------------------------------------------
def _epilogue_kernel(pooled_ref, wfc_ref, bns_ref, bnb_ref, wh_ref, bh_ref,
                     out_ref, *, inv_t, n_sig, n_k):
    pooled = pooled_ref[...]                                    # (B, C_pad)
    h = jnp.dot(pooled, wfc_ref[...],
                preferred_element_type=jnp.float32)             # (B, A_pad)
    h = jnp.maximum(h * bns_ref[...] + bnb_ref[...], 0.0)       # folded BN + ReLU

    # fused channel|filter|kernel heads: one lane-dense MXU pass
    z = (jnp.dot(h, wh_ref[...], preferred_element_type=jnp.float32)
         + bh_ref[...]) * inv_t                                 # (B, P)

    lane = jax.lax.broadcasted_iota(jnp.int32, z.shape, 1)
    is_sig = lane < n_sig
    is_k = jnp.logical_and(lane >= n_sig, lane < n_sig + n_k)

    # numerically-safe sigmoid (exact; runs once per call)
    e_s = jnp.exp(-jnp.abs(z))
    sig = jnp.where(z >= 0, 1.0, e_s) / (1.0 + e_s)

    # masked softmax over the kernel-attention lanes (exact reciprocal so the
    # kernel_attention rows sum to 1.0)
    zk = jnp.where(is_k, z, jnp.float32(-1e30))
    zk = zk - jnp.max(zk, axis=-1, keepdims=True)
    e_k = jnp.where(is_k, jnp.exp(zk), 0.0)
    ksm = e_k / jnp.sum(e_k, axis=-1, keepdims=True)

    out_ref[...] = jnp.where(is_sig, sig, ksm)


# --------------------------------------------------------------------------
# Wrapper
# --------------------------------------------------------------------------
def attention_forward(x, params, temperature=1.0):
    """x: (B, C_in, H, W) float32 (NCHW, like PyTorch)."""
    B, C_in, H, W = x.shape
    HW = H * W
    R = B * C_in
    A = params["w_fc"].shape[1]
    out_planes = params["w_fl"].shape[1]
    kernel_num = params["w_k"].shape[1]

    x2d = x.reshape(R, HW)

    # ---- tiling from an explicit VMEM budget (safe on v5e/v6e/v7x) ----------
    X_TILE_BUDGET = 8 * 1024 * 1024          # bytes for the pipelined x tiles
    RB = _pick_row_block(R, max(8, X_TILE_BUDGET // (2 * 4 * 512)))
    max_thw = max(128, (X_TILE_BUDGET // (2 * RB * 4)) // 128 * 128)
    THW = min(_round_up(HW, 128), max_thw)
    n_r = R // RB
    n_t = _cdiv(HW, THW)
    ragged = (HW % THW) != 0

    # deeper pipelining of x only when the spatial sweep is long enough
    n_buf = 3 if n_t >= 4 else 2
    x_spec_kwargs = {}
    if n_buf == 3:
        x_spec_kwargs["pipeline_mode"] = pl.Buffered(3)
    x_spec = pl.BlockSpec((RB, THW), lambda r, t: (r, t), **x_spec_kwargs)

    x_tile_bytes = RB * THW * 4
    vmem_limit = int(n_buf * x_tile_bytes            # pipelined x tiles
                     + RB * 128 * 4                  # lane-blocked accumulator
                     + 2 * RB * 128 * 4              # output block (lane-padded)
                     + (2 << 20))                    # headroom
    vmem_limit = max(vmem_limit, 4 << 20)

    cost = pl.CostEstimate(flops=R * HW, transcendentals=0,
                           bytes_accessed=R * HW * 4 + R * 4)

    pooled = pl.pallas_call(
        partial(_pool_sum_kernel, hw=HW, thw=THW,
                inv_hw=1.0 / float(HW), ragged=ragged),
        out_shape=jax.ShapeDtypeStruct((R, 1), jnp.float32),
        grid_spec=pltpu.PrefetchScalarGridSpec(
            num_scalar_prefetch=0,
            grid=(n_r, n_t),
            in_specs=[x_spec],
            out_specs=pl.BlockSpec((RB, 1), lambda r, t: (r, 0)),
            scratch_shapes=[pltpu.VMEM((RB, 128), jnp.float32)],
        ),
        compiler_params=pltpu.CompilerParams(
            dimension_semantics=("parallel", "arbitrary"),
            vmem_limit_bytes=vmem_limit),
        cost_estimate=cost,
    )(x2d)

    # ---- tiny epilogue kernel (lane-padded parameters, one invocation) ------
    C_pad = _round_up(C_in, 128)
    A_pad = _round_up(A, 128)
    total = C_in + out_planes + kernel_num
    P = _round_up(total, 128)

    pooled_pad = jnp.pad(pooled.reshape(B, C_in), ((0, 0), (0, C_pad - C_in)))
    w_fc_pad = jnp.pad(params["w_fc"], ((0, C_pad - C_in), (0, A_pad - A)))
    bns_pad = jnp.pad(params["bn_scale"], ((0, 0), (0, A_pad - A)))
    bnb_pad = jnp.pad(params["bn_bias"], ((0, 0), (0, A_pad - A)))
    w_heads = jnp.pad(
        jnp.concatenate([params["w_ch"], params["w_fl"], params["w_k"]], axis=1),
        ((0, A_pad - A), (0, P - total)))
    b_heads = jnp.pad(
        jnp.concatenate([params["b_ch"], params["b_fl"], params["b_k"]], axis=1),
        ((0, 0), (0, P - total)))

    out = pl.pallas_call(
        partial(_epilogue_kernel, inv_t=1.0 / float(temperature),
                n_sig=C_in + out_planes, n_k=kernel_num),
        out_shape=jax.ShapeDtypeStruct((B, P), jnp.float32),
    )(pooled_pad, w_fc_pad, bns_pad, bnb_pad, w_heads, b_heads)

    # Slice the lane-dense slab into the PyTorch output views.
    channel_attention = out[:, :C_in].reshape(B, C_in, 1, 1)
    filter_attention = out[:, C_in:C_in + out_planes].reshape(B, out_planes, 1, 1)
    kernel_attention = out[:, C_in + out_planes:total].reshape(
        B, kernel_num, 1, 1, 1, 1)
    return channel_attention, filter_attention, kernel_attention


def init_attention_params(key, in_planes, out_planes, kernel_num=4,
                          reduction=0.0625, min_channel=16):
    """Matches Attention._initialize_weights: kaiming_normal_(fan_out, relu)
    for conv weights, zero biases, BN gamma=1/beta=0 with default stats."""
    attention_channel = max(int(in_planes * reduction), min_channel)
    k_fc, k_ch, k_fl, k_k = jax.random.split(key, 4)

    def kaiming_fan_out(k, out_c, in_c):
        std = (2.0 / out_c) ** 0.5           # Conv2d 1x1: fan_out = out_c
        w = std * jax.random.normal(k, (out_c, in_c), jnp.float32)
        return w.T                            # stored (in_c, out_c)

    w_fc = kaiming_fan_out(k_fc, attention_channel, in_planes)
    w_ch = kaiming_fan_out(k_ch, in_planes, attention_channel)
    w_fl = kaiming_fan_out(k_fl, out_planes, attention_channel)
    w_k = kaiming_fan_out(k_k, kernel_num, attention_channel)

    b_ch = jnp.zeros((1, in_planes), jnp.float32)
    b_fl = jnp.zeros((1, out_planes), jnp.float32)
    b_k = jnp.zeros((1, kernel_num), jnp.float32)

    # BatchNorm2d (eval) folded into scale/bias
    eps = 1e-5
    gamma = jnp.ones((attention_channel,), jnp.float32)
    beta = jnp.zeros((attention_channel,), jnp.float32)
    running_mean = jnp.zeros((attention_channel,), jnp.float32)
    running_var = jnp.ones((attention_channel,), jnp.float32)
    inv_std = gamma / jnp.sqrt(running_var + eps)
    bn_scale = inv_std.reshape(1, attention_channel)
    bn_bias = (beta - running_mean * inv_std).reshape(1, attention_channel)

    return dict(w_fc=w_fc, bn_scale=bn_scale, bn_bias=bn_bias,
                w_ch=w_ch, b_ch=b_ch, w_fl=w_fl, b_fl=b_fl,
                w_k=w_k, b_k=b_k)


def _reference(x, params, temperature):
    B, C_in, H, W = x.shape
    pooled = jnp.mean(x.reshape(B, C_in, -1), axis=-1)
    h = pooled @ params["w_fc"]
    h = jnp.maximum(h * params["bn_scale"] + params["bn_bias"], 0.0)
    ch = jax.nn.sigmoid((h @ params["w_ch"] + params["b_ch"]) / temperature)
    fl = jax.nn.sigmoid((h @ params["w_fl"] + params["b_fl"]) / temperature)
    kk = jax.nn.softmax((h @ params["w_k"] + params["b_k"]) / temperature, axis=-1)
    out_planes = params["w_fl"].shape[1]
    kernel_num = params["w_k"].shape[1]
    return (ch.reshape(B, C_in, 1, 1),
            fl.reshape(B, out_planes, 1, 1),
            kk.reshape(B, kernel_num, 1, 1, 1, 1))


if __name__ == "__main__":
    key = jax.random.PRNGKey(0)
    k_x, k_p = jax.random.split(key)

    # in_planes=4, out_planes=8, kernel_num=4 -> attention_channel = 16.
    B, C_in, H, W = 2, 4, 16, 16
    out_planes, kernel_num = 8, 4

    x = jax.random.normal(k_x, (B, C_in, H, W), dtype=jnp.float32)
    params = init_attention_params(k_p, C_in, out_planes, kernel_num)

    ch_att, fl_att, k_att = attention_forward(x, params, temperature=1.0)
    jax.block_until_ready((ch_att, fl_att, k_att))

    assert ch_att.shape == (B, C_in, 1, 1)
    assert fl_att.shape == (B, out_planes, 1, 1)
    assert k_att.shape == (B, kernel_num, 1, 1, 1, 1)
    # softmax over dim=1 must sum to 1 per batch element
    assert jnp.allclose(jnp.sum(k_att, axis=1), 1.0, atol=1e-3)

    # Cross-check against a pure-JAX reference of the same forward math.
    ch_r, fl_r, k_r = _reference(x, params, 1.0)
    assert jnp.allclose(ch_att, ch_r, atol=1e-3)
    assert jnp.allclose(fl_att, fl_r, atol=1e-3)
    assert jnp.allclose(k_att, k_r, atol=1e-3)

    print("KERNEL_OK")
</pallas_src>

<mosaic_0001>
module attributes {stable_mosaic.version = 11 : i64} {
  func.func @_pool_sum_kernel(%arg0: i32, %arg1: i32, %arg2: memref<8x256xf32, #tpu.memory_space<vmem>>, %arg3: memref<8x1xf32, #tpu.memory_space<vmem>>, %arg4: memref<8x128xf32, #tpu.memory_space<vmem>>) attributes {dimension_semantics = [#tpu.dimension_semantics<parallel>, #tpu.dimension_semantics<arbitrary>], iteration_bounds = array<i64: 1, 1>, scalar_prefetch = 0 : i64, scratch_operands = 1 : i64, tpu.core_type = #tpu.core_type<tc>, window_params = [{transform_indices = @transform_0, window_bounds = array<i64: 8, 256>}, {transform_indices = @transform_1, window_bounds = array<i64: 8, 1>}]} {
    %c0_i32 = arith.constant 0 : i32
    %0 = arith.cmpi eq, %arg1, %c0_i32 : i32
    %1 = arith.extui %0 : i1 to i32
    %c0_i32_0 = arith.constant 0 : i32
    %2 = arith.cmpi ne, %1, %c0_i32_0 : i32
    scf.if %2 {
      %cst = arith.constant 0.000000e+00 : f32
      %13 = vector.broadcast %cst : f32 to vector<8x128xf32>
      %c0_8 = arith.constant 0 : index
      %c0_9 = arith.constant 0 : index
      %14 = vector.load %arg4[%c0_8, %c0_9] : memref<8x128xf32, #tpu.memory_space<vmem>>, vector<8x128xf32>
      tpu.vector_store %arg4[%c0_8, %c0_9], %13 {strides = array<i32>} : memref<8x128xf32, #tpu.memory_space<vmem>>, vector<8x128xf32>,
    } else {
    }
    %c0 = arith.constant 0 : index
    %c0_1 = arith.constant 0 : index
    %3 = vector.load %arg2[%c0, %c0_1] : memref<8x256xf32, #tpu.memory_space<vmem>>, vector<8x256xf32>
    %4 = vector.extract_strided_slice %3 {offsets = [0, 0], sizes = [8, 128], strides = [1, 1]} : vector<8x256xf32> to vector<8x128xf32>
    %5 = vector.extract_strided_slice %3 {offsets = [0, 128], sizes = [8, 128], strides = [1, 1]} : vector<8x256xf32> to vector<8x128xf32>
    %6 = arith.addf %4, %5 : vector<8x128xf32>
    %c0_2 = arith.constant 0 : index
    %c0_3 = arith.constant 0 : index
    %7 = vector.load %arg4[%c0_2, %c0_3] : memref<8x128xf32, #tpu.memory_space<vmem>>, vector<8x128xf32>
    %8 = arith.addf %7, %6 : vector<8x128xf32>
    %c0_4 = arith.constant 0 : index
    %c0_5 = arith.constant 0 : index
    %9 = vector.load %arg4[%c0_4, %c0_5] : memref<8x128xf32, #tpu.memory_space<vmem>>, vector<8x128xf32>
    tpu.vector_store %arg4[%c0_4, %c0_5], %8 {strides = array<i32>} : memref<8x128xf32, #tpu.memory_space<vmem>>, vector<8x128xf32>,
    %c0_i32_6 = arith.constant 0 : i32
    %10 = arith.cmpi eq, %arg1, %c0_i32_6 : i32
    %11 = arith.extui %10 : i1 to i32
    %c0_i32_7 = arith.constant 0 : i32
    %12 = arith.cmpi ne, %11, %c0_i32_7 : i32
    scf.if %12 {
      %c0_8 = arith.constant 0 : index
      %c0_9 = arith.constant 0 : index
      %13 = vector.load %arg4[%c0_8, %c0_9] : memref<8x128xf32, #tpu.memory_space<vmem>>, vector<8x128xf32>
      %cst = arith.constant dense<0.000000e+00> : vector<8xf32>
      %14 = vector.multi_reduction <add>, %13, %cst [1] : vector<8x128xf32> to vector<8xf32>
      %15 = vector.shape_cast %14 : vector<8xf32> to vector<8x1xf32>
      %cst_10 = arith.constant 3.906250e-03 : f32
      %16 = vector.broadcast %cst_10 : f32 to vector<8x1xf32>
      %17 = arith.mulf %15, %16 : vector<8x1xf32>
      %c0_11 = arith.constant 0 : index
      %c0_12 = arith.constant 0 : index
      %18 = vector.load %arg3[%c0_11, %c0_12] : memref<8x1xf32, #tpu.memory_space<vmem>>, vector<8x1xf32>
      tpu.vector_store %arg3[%c0_11, %c0_12], %17 {strides = array<i32>} : memref<8x1xf32, #tpu.memory_space<vmem>>, vector<8x1xf32>,
    } else {
    }
    return
  }
  func.func @transform_0(%arg0: i32, %arg1: i32) -> (i32, i32) {
    %c0_i32 = arith.constant 0 : i32
    return %arg0, %arg1 : i32, i32
  }
  func.func @transform_1(%arg0: i32, %arg1: i32) -> (i32, i32) {
    %c0_i32 = arith.constant 0 : i32
    %c0_i32_0 = arith.constant 0 : i32
    return %arg0, %c0_i32 : i32, i32
  }
}

</mosaic_0001>

<llo_original>
// kernel: tpu_custom_call.1
$region0: #{tpu_custom_call.1}
  #allocation0 [shape = 'u32[]', space=smem, size = 0x4, offset = 0x4, fixed_abs, tag = 'smem constant byte address 0x4 - core index']
  #allocation1 [shape = 'u32[144,128]{1,0:T(1,128)}', space=vmem, size = 0x12000, scoped, tag = 'internal scratch']
  #allocation2 [shape = 'f32[8,128]{1,0:T(8,128)}', space=vmem, size = 0x1000, scoped, tag = 'scratch operand']
  %s0 = inlined_call_operand.hbm [shape: f32[8,256], index: 0, kind: input, shape index: {}]
  %s1 = inlined_call_operand.vmem [shape: f32[8,1], index: 1, kind: output, shape index: {}]
  %s2 = sld [smem:[#allocation0]]
  $region26: #{tpu_custom_call.1} parent=0
    _
  %s4 = ssub.s32 1, %s2
  %s5 = scalar_select 0, %s4, %s2
  $region1: #{tpu_custom_call.1} parent=0
    #allocation3 [shape = 'u8[8192]{0}', space=vmem, size = 0x2000, scoped, tag = 'input window, operand 0, single buffered']
    #allocation4 [shape = 's32[1]{0}', space=sflag, size = 0x4, scoped, tag = 'scoped memory for tpu_custom_call.1']
    %6 = vsyncpa [#allocation4], 0
    // Predicated region
    $region2: #{tpu_custom_call.1} parent=1 // pred_check
      _
    $region3: #{tpu_custom_call.1} parent=1 // pred_check_branch
      %8 = sbr.rel (0) target = $region5
    $region4: #{tpu_custom_call.1} parent=1 // pred_region
      %s10 = ssub.s32 256, 256
      %11 = vsyncadd [#allocation4], %s10
      %s13 = sshll.u32 [#allocation3], 4
      %s14 = int_to_ptr.vmem [resolvable:$true] %s13
      %16 = dma.hbm_to_vmem [thread:$0]  %s0, 256, %s14, [#allocation4]
    $region5: #{tpu_custom_call.1} parent=1 // pred_fallthru
      _
    // Predicated region
    $region6: #{tpu_custom_call.1} parent=1 // pred_check
      _
    $region7: #{tpu_custom_call.1} parent=1 // pred_check_branch
      %18 = sbr.rel (0) target = $region9
    $region8: #{tpu_custom_call.1} parent=1 // pred_region
      %19 = dma.done [#allocation4], 256
    $region9: #{tpu_custom_call.1} parent=1 // pred_fallthru
      _
    %p20 = scmp.eq.s32.totalorder 0, 0
    // Predicated region
    $region10: #{tpu_custom_call.1} parent=1 // pred_check
      %p21 = pneg %p20
    $region11: #{tpu_custom_call.1} parent=1 // pred_check_branch
      %23 = sbr.rel (%p21) target = $region13
    $region12: #{tpu_custom_call.1} parent=1 // pred_region
      %24 = vst [vmem:[#allocation2] sm:$0xff] 0.0
    $region13: #{tpu_custom_call.1} parent=1 // pred_fallthru
      _
    %v25 = vld [vmem:[#allocation3] sm:$0xff]
    %v26 = vld [vmem:[#allocation3 + $0x8] sm:$0xff]
    %v27 = vadd.f32 %v25, %v26
    %v28 = vld [vmem:[#allocation2] sm:$0xff]
    %v29 = vadd.f32 %v28, %v27
    %30 = vst [vmem:[#allocation2] sm:$0xff] %v29
    // Predicated region
    $region14: #{tpu_custom_call.1} parent=1 // pred_check
      %p31 = pneg %p20
    $region15: #{tpu_custom_call.1} parent=1 // pred_check_branch
      %33 = sbr.rel (%p31) target = $region17
    $region16: #{tpu_custom_call.1} parent=1 // pred_region
      %v34 = vld [vmem:[#allocation2] sm:$0xff]
      %35 = vadd.xlane.f32.xlu0 %v34
      %v36 = vpop.xlane.xlu0 %35
      %v37 = vmul.f32 %v36, 0.00390625
      %vm38 = vcmask 7168
      %39 = vst.msk [vmem:[%s1] sm:$0xff] %vm38, %v37
    $region17: #{tpu_custom_call.1} parent=1 // pred_fallthru
      _
    // Predicated region
    $region18: #{tpu_custom_call.1} parent=1 // pred_check
      _
    $region19: #{tpu_custom_call.1} parent=1 // pred_check_branch
      %41 = sbr.rel (0) target = $region21
    $region20: #{tpu_custom_call.1} parent=1 // pred_region
      _
    $region21: #{tpu_custom_call.1} parent=1 // pred_fallthru
      _
    // Predicated region
    $region22: #{tpu_custom_call.1} parent=1 // pred_check
      _
    $region23: #{tpu_custom_call.1} parent=1 // pred_check_branch
      %43 = sbr.rel (0) target = $region25
    $region24: #{tpu_custom_call.1} parent=1 // pred_region
      _
    $region25: #{tpu_custom_call.1} parent=1 // pred_fallthru
      _
    %44 = vsyncpa [#allocation4], 1

</llo_original>
